<compile_context>
chip_gen: v5e
topology: v5e:2x2
jax: 0.10.0
libtpu: 0.0.40
codegen_flags: <defaults>
</compile_context>

<pallas_src>
import functools

import jax
import jax.numpy as jnp
from jax import lax
from jax.experimental import pallas as pl
from jax.experimental.pallas import tpu as pltpu

LANES = 128


def _cdiv(a, b):
    return -(-a // b)


def _round_up(a, b):
    return _cdiv(a, b) * b


def _default_num_slices():
    # 2 slices only helps when there are two TensorCores per chip (v7x).
    try:
        kind = jax.devices()[0].device_kind.lower()
    except Exception:
        return 1
    return 2 if ("v7" in kind or "7x" in kind) else 1


def _poisson_loss_kernel(lam_ref, x_ref, out_ref, *,
                         rows_valid, tile_rows, steps_per_slice,
                         total_blocks, sub, mask_boundary, guard_blocks):
    c = pl.program_id(0)            # slice (megacore-parallel axis on v7x)
    i = pl.program_id(1)            # sequential reduction step within a slice
    blk = c * steps_per_slice + i   # global block index

    # Output block (1, sub, LANES) stays VMEM-resident across the reduction
    # axis -> it IS the accumulator (no scratch needed).
    @pl.when(i == 0)
    def _():
        out_ref[...] = jnp.zeros_like(out_ref)

    def block_sum(apply_row_mask):
        lam = lam_ref[...].astype(jnp.float32)
        x = x_ref[...].astype(jnp.float32)
        # term = x * log(lambda + 0.01) - lambda   (EUP log, VPU mul/sub)
        term = x * jnp.log(lam + jnp.float32(0.01)) - lam
        if apply_row_mask:
            # Only the boundary block ever takes this path: zero the Pallas
            # block-padding garbage rows beyond the real array extent.
            row = blk * tile_rows + lax.broadcasted_iota(jnp.int32, term.shape, 0)
            term = jnp.where(row < rows_valid, term, jnp.float32(0.0))
        # Fold the tile into (sub, LANES): groups of `sub` consecutive rows are
        # exactly vreg tiles, so this is straight VALU adds (no XLU, and only a
        # handful of accumulator loads/stores per step).
        return term.reshape(-1, sub, LANES).sum(axis=0)[None]

    if guard_blocks:
        last = total_blocks - 1

        @pl.when(blk < last)
        def _():
            out_ref[...] += block_sum(False)          # steady-state fast path

        @pl.when(blk == last)
        def _():
            out_ref[...] += block_sum(mask_boundary)  # boundary block (masked
                                                      # only if partial)
        # blk > last (clamped overhang work item): contributes nothing.
    else:
        out_ref[...] += block_sum(False)


@functools.partial(jax.jit, static_argnames=("tile_rows", "num_slices"))
def poisson_log_likelihood_loss(lambda_t, x, tile_rows=4096, num_slices=None):
    assert lambda_t.shape == x.shape, "lambda_t and x must have the same shape"

    n = lambda_t.size                      # static under jit
    if n == 0:
        return jnp.zeros((), jnp.float32)

    if num_slices is None:
        num_slices = _default_num_slices()

    lam_flat = lambda_t.reshape(-1)        # bitcast, no copy, native dtype
    x_flat = x.reshape(-1)

    total = jnp.zeros((), jnp.float32)

    # Ragged tail (< 128 elements): tiny jnp expression in the wrapper so the
    # bulk arrays are never padded/copied and the kernel needs no element mask.
    n_main = (n // LANES) * LANES
    if n_main != n:
        t_lam = lam_flat[n_main:].astype(jnp.float32)
        t_x = x_flat[n_main:].astype(jnp.float32)
        total = total + jnp.sum(t_x * jnp.log(t_lam + jnp.float32(0.01)) - t_lam)

    if n_main > 0:
        rows = n_main // LANES
        lam2d = lam_flat[:n_main].reshape(rows, LANES)   # identity when aligned
        x2d = x_flat[:n_main].reshape(rows, LANES)

        # Sublane packing: 8 rows for 4-byte, 16 for 2-byte, 32 for 1-byte.
        sub = max(8, 32 // lam2d.dtype.itemsize, 32 // x2d.dtype.itemsize)

        # Tile selection: large blocks amortize per-step overhead; small
        # inputs collapse to a single (possibly partial) block.
        tr = _round_up(max(int(tile_rows), sub), sub)
        tr = min(tr, _round_up(rows, sub))
        total_blocks = _cdiv(rows, tr)

        ns = max(1, min(int(num_slices), total_blocks))
        steps = _cdiv(total_blocks, ns)

        mask_boundary = (rows % tr) != 0                 # partial last block
        has_overhang = ns * steps != total_blocks        # clamped dup blocks
        guard_blocks = mask_boundary or has_overhang

        if has_overhang:
            def in_map(c, i):
                return (jnp.minimum(c * steps + i, total_blocks - 1), 0)
        else:
            def in_map(c, i):
                return (c * steps + i, 0)

        kernel = functools.partial(
            _poisson_loss_kernel,
            rows_valid=rows, tile_rows=tr, steps_per_slice=steps,
            total_blocks=total_blocks, sub=sub,
            mask_boundary=mask_boundary, guard_blocks=guard_blocks)

        # 2 inputs x 2 pipeline buffers + f32 intermediates + slack.
        block_bytes = tr * LANES * (lam2d.dtype.itemsize + x2d.dtype.itemsize)
        vmem_limit = min(max(4 * block_bytes + (8 << 20), 16 << 20), 64 << 20)

        partials = pl.pallas_call(
            kernel,
            out_shape=jax.ShapeDtypeStruct((ns, sub, LANES), jnp.float32),
            grid_spec=pltpu.PrefetchScalarGridSpec(
                num_scalar_prefetch=0,
                grid=(ns, steps),
                in_specs=[
                    pl.BlockSpec((tr, LANES), in_map),
                    pl.BlockSpec((tr, LANES), in_map),
                ],
                out_specs=pl.BlockSpec((1, sub, LANES), lambda c, i: (c, 0, 0)),
            ),
            compiler_params=pltpu.CompilerParams(
                dimension_semantics=("parallel", "arbitrary"),
                vmem_limit_bytes=vmem_limit,
            ),
        )(lam2d, x2d)

        # Single final cross-lane reduce of a few vregs per slice (wrapper-side).
        total = total + jnp.sum(partials)

    return -total


def _reference_loss(lambda_t, x):
    lam = lambda_t.astype(jnp.float32)
    xf = x.astype(jnp.float32)
    return -jnp.sum(xf * jnp.log(lam + 0.01) - lam)


if __name__ == "__main__":
    key = jax.random.PRNGKey(0)
    k1, k2, k3, k4, k5, k6 = jax.random.split(key, 6)

    # Primary test: small NCHW-shaped example (128-aligned size -> zero-copy).
    shape = (2, 4, 16, 16)
    lambda_t = jax.random.uniform(k1, shape, jnp.float32, minval=0.1, maxval=5.0)
    x = jax.random.poisson(k2, lam=2.0, shape=shape).astype(jnp.float32)

    loss = jax.block_until_ready(poisson_log_likelihood_loss(lambda_t, x))
    ref = _reference_loss(lambda_t, x)
    assert jnp.allclose(loss, ref, rtol=1e-4, atol=1e-2), (loss, ref)

    # Secondary test: multi-block, 2-slice grid (small tile forces several
    # grid steps and exercises the parallel leading axis).
    shape2 = (4, 4, 32, 32)
    l2 = jax.random.uniform(k3, shape2, jnp.float32, minval=0.1, maxval=5.0)
    x2 = jax.random.poisson(k4, lam=2.0, shape=shape2).astype(jnp.float32)
    loss2 = jax.block_until_ready(
        poisson_log_likelihood_loss(l2, x2, tile_rows=32, num_slices=2))
    ref2 = _reference_loss(l2, x2)
    assert jnp.allclose(loss2, ref2, rtol=1e-4, atol=1e-2), (loss2, ref2)

    # Tertiary test: ragged size -> exercises the jnp tail path plus the
    # in-kernel boundary-block row mask on a partial last block.
    shape3 = (5, 999)
    l3 = jax.random.uniform(k5, shape3, jnp.float32, minval=0.1, maxval=5.0)
    x3 = jax.random.poisson(k6, lam=2.0, shape=shape3).astype(jnp.float32)
    loss3 = jax.block_until_ready(
        poisson_log_likelihood_loss(l3, x3, tile_rows=32, num_slices=2))
    ref3 = _reference_loss(l3, x3)
    assert jnp.allclose(loss3, ref3, rtol=1e-4, atol=1e-2), (loss3, ref3)

    print("KERNEL_OK")
</pallas_src>

<mosaic_0001>
module attributes {stable_mosaic.version = 11 : i64} {
  func.func @_poisson_loss_kernel(%arg0: i32, %arg1: i32, %arg2: memref<16x128xf32, #tpu.memory_space<vmem>>, %arg3: memref<16x128xf32, #tpu.memory_space<vmem>>, %arg4: memref<1x8x128xf32, #tpu.memory_space<vmem>>) attributes {dimension_semantics = [#tpu.dimension_semantics<parallel>, #tpu.dimension_semantics<arbitrary>], iteration_bounds = array<i64: 1, 1>, scalar_prefetch = 0 : i64, scratch_operands = 0 : i64, tpu.core_type = #tpu.core_type<tc>, window_params = [{transform_indices = @transform_0, window_bounds = array<i64: 16, 128>}, {transform_indices = @transform_1, window_bounds = array<i64: 16, 128>}, {transform_indices = @transform_2, window_bounds = array<i64: 1, 8, 128>}]} {
    %c0_i32 = arith.constant 0 : i32
    %0 = arith.cmpi eq, %arg1, %c0_i32 : i32
    %1 = arith.extui %0 : i1 to i32
    %c0_i32_0 = arith.constant 0 : i32
    %2 = arith.cmpi ne, %1, %c0_i32_0 : i32
    scf.if %2 {
      %cst_11 = arith.constant 0.000000e+00 : f32
      %16 = vector.broadcast %cst_11 : f32 to vector<1x8x128xf32>
      %c0_12 = arith.constant 0 : index
      %c0_13 = arith.constant 0 : index
      %c0_14 = arith.constant 0 : index
      %17 = vector.load %arg4[%c0_12, %c0_13, %c0_14] : memref<1x8x128xf32, #tpu.memory_space<vmem>>, vector<1x8x128xf32>
      tpu.vector_store %arg4[%c0_12, %c0_13, %c0_14], %16 {strides = array<i32>} : memref<1x8x128xf32, #tpu.memory_space<vmem>>, vector<1x8x128xf32>,
    } else {
    }
    %c0 = arith.constant 0 : index
    %c0_1 = arith.constant 0 : index
    %c0_2 = arith.constant 0 : index
    %3 = vector.load %arg4[%c0, %c0_1, %c0_2] : memref<1x8x128xf32, #tpu.memory_space<vmem>>, vector<1x8x128xf32>
    %c0_3 = arith.constant 0 : index
    %c0_4 = arith.constant 0 : index
    %4 = vector.load %arg2[%c0_3, %c0_4] : memref<16x128xf32, #tpu.memory_space<vmem>>, vector<16x128xf32>
    %c0_5 = arith.constant 0 : index
    %c0_6 = arith.constant 0 : index
    %5 = vector.load %arg3[%c0_5, %c0_6] : memref<16x128xf32, #tpu.memory_space<vmem>>, vector<16x128xf32>
    %cst = arith.constant 0.00999999977 : f32
    %6 = vector.broadcast %cst : f32 to vector<16x128xf32>
    %7 = arith.addf %4, %6 : vector<16x128xf32>
    %8 = math.log %7 : vector<16x128xf32>
    %9 = arith.mulf %5, %8 : vector<16x128xf32>
    %10 = arith.subf %9, %4 : vector<16x128xf32>
    %11 = vector.shape_cast %10 : vector<16x128xf32> to vector<2x8x128xf32>
    %cst_7 = arith.constant dense<0.000000e+00> : vector<8x128xf32>
    %12 = vector.multi_reduction <add>, %11, %cst_7 [0] : vector<2x8x128xf32> to vector<8x128xf32>
    %13 = vector.shape_cast %12 : vector<8x128xf32> to vector<1x8x128xf32>
    %14 = arith.addf %3, %13 : vector<1x8x128xf32>
    %c0_8 = arith.constant 0 : index
    %c0_9 = arith.constant 0 : index
    %c0_10 = arith.constant 0 : index
    %15 = vector.load %arg4[%c0_8, %c0_9, %c0_10] : memref<1x8x128xf32, #tpu.memory_space<vmem>>, vector<1x8x128xf32>
    tpu.vector_store %arg4[%c0_8, %c0_9, %c0_10], %14 {strides = array<i32>} : memref<1x8x128xf32, #tpu.memory_space<vmem>>, vector<1x8x128xf32>,
    return
  }
  func.func @transform_0(%arg0: i32, %arg1: i32) -> (i32, i32) {
    %c1_i32 = arith.constant 1 : i32
    %0 = arith.muli %arg0, %c1_i32 : i32
    %1 = arith.addi %0, %arg1 : i32
    %c0_i32 = arith.constant 0 : i32
    %c0_i32_0 = arith.constant 0 : i32
    return %1, %c0_i32 : i32, i32
  }
  func.func @transform_1(%arg0: i32, %arg1: i32) -> (i32, i32) {
    %c1_i32 = arith.constant 1 : i32
    %0 = arith.muli %arg0, %c1_i32 : i32
    %1 = arith.addi %0, %arg1 : i32
    %c0_i32 = arith.constant 0 : i32
    %c0_i32_0 = arith.constant 0 : i32
    return %1, %c0_i32 : i32, i32
  }
  func.func @transform_2(%arg0: i32, %arg1: i32) -> (i32, i32, i32) {
    %c0_i32 = arith.constant 0 : i32
    %c0_i32_0 = arith.constant 0 : i32
    %c0_i32_1 = arith.constant 0 : i32
    return %arg0, %c0_i32, %c0_i32_0 : i32, i32, i32
  }
}

</mosaic_0001>

<llo_original>
// kernel: poisson_log_likelihood_loss.1
$region0: #{poisson_log_likelihood_loss.1}
  #allocation0 [shape = 'u32[]', space=smem, size = 0x4, offset = 0x4, fixed_abs, tag = 'smem constant byte address 0x4 - core index']
  #allocation1 [shape = 'u32[72,128]{1,0:T(1,128)}', space=vmem, size = 0x9000, scoped, tag = 'internal scratch']
  %s0 = inlined_call_operand.vmem [shape: f32[16,128], index: 0, kind: input, shape index: {}]
  %s1 = inlined_call_operand.vmem [shape: f32[16,128], index: 1, kind: input, shape index: {}]
  %s2 = inlined_call_operand.vmem [shape: f32[1,8,128], index: 2, kind: output, shape index: {}]
  %s3 = sld [smem:[#allocation0]]
  $region22: #{poisson_log_likelihood_loss.1} parent=0
    _
  %s5 = ssub.s32 1, %s3
  %s6 = scalar_select 0, %s5, %s3
  // Predicated region
  $region2: #{poisson_log_likelihood_loss.1} parent=0 // pred_check
    _
  $region3: #{poisson_log_likelihood_loss.1} parent=0 // pred_check_branch
    %8 = sbr.rel (0) target = $region5
  $region4: #{poisson_log_likelihood_loss.1} parent=0 // pred_region
    %s9 = sadd.s32 0, 0
    %s10 = smul.u32 2, %s9
    %p11 = scmp.lt.s32.totalorder %s10, 1
    %s12 = scalar_select %p11, %s10, 1
    %s13 = smul.addr %s12, 8
    %s14 = scalar_lea.vmem %s0, %s13
    %s15 = sadd.s32 0, 0
    %s16 = smul.u32 2, %s15
  $region5: #{poisson_log_likelihood_loss.1} parent=0 // pred_fallthru
    _
  // Predicated region
  $region6: #{poisson_log_likelihood_loss.1} parent=0 // pred_check
    _
  $region7: #{poisson_log_likelihood_loss.1} parent=0 // pred_check_branch
    %18 = sbr.rel (0) target = $region9
  $region8: #{poisson_log_likelihood_loss.1} parent=0 // pred_region
    %s19 = sadd.s32 0, 0
    %s20 = smul.u32 2, %s19
    %p21 = scmp.lt.s32.totalorder %s20, 1
    %s22 = scalar_select %p21, %s20, 1
    %s23 = smul.addr %s22, 8
    %s24 = scalar_lea.vmem %s1, %s23
    %s25 = sadd.s32 0, 0
    %s26 = smul.u32 2, %s25
  $region9: #{poisson_log_likelihood_loss.1} parent=0 // pred_fallthru
    _
  %s27 = sadd.s32 0, 0
  %s28 = smul.u32 2, %s27
  %p29 = scmp.lt.s32.totalorder %s28, 1
  %s30 = scalar_select %p29, %s28, 1
  %s31 = smul.addr %s30, 8
  %s32 = scalar_lea.vmem %s0, %s31
  %s33 = sadd.s32 0, 0
  %s34 = smul.u32 2, %s33
  %p35 = scmp.lt.s32.totalorder %s34, 1
  %s36 = scalar_select %p35, %s34, 1
  %s37 = smul.addr %s36, 8
  %s38 = scalar_lea.vmem %s1, %s37
  %s39 = sadd.s32 0, 0
  %s40 = smul.u32 2, %s39
  %p41 = scmp.lt.s32.totalorder %s40, 1
  %s42 = scalar_select %p41, %s40, 1
  %s43 = smul.addr %s42, 8
  %s44 = scalar_lea.vmem %s0, %s43
  %s45 = sadd.s32 0, 0
  %s46 = smul.u32 2, %s45
  %s47 = sadd.s32 0, 0
  %s48 = smul.u32 2, %s47
  %p49 = scmp.lt.s32.totalorder %s48, 1
  %s50 = scalar_select %p49, %s48, 1
  %s51 = smul.addr %s50, 8
  %s52 = scalar_lea.vmem %s1, %s51
  %s53 = sadd.s32 0, 0
  %s54 = smul.u32 2, %s53
  %p55 = scmp.eq.s32.totalorder 0, 0
  // Predicated region
  $region10: #{poisson_log_likelihood_loss.1} parent=0 // pred_check
    %p56 = pneg %p55
  $region11: #{poisson_log_likelihood_loss.1} parent=0 // pred_check_branch
    %58 = sbr.rel (%p56) target = $region13
  $region12: #{poisson_log_likelihood_loss.1} parent=0 // pred_region
    %59 = vst [vmem:[%s2] sm:$0xff] 0.0
  $region13: #{poisson_log_likelihood_loss.1} parent=0 // pred_fallthru
    _
  %v60 = vld [vmem:[%s2] sm:$0xff]
  %v61 = vld [vmem:[%s44] sm:$0xff]
  %v62 = vld [vmem:[%s44 + $0x8] sm:$0xff]
  %v63 = vld [vmem:[%s52] sm:$0xff]
  %v64 = vld [vmem:[%s52 + $0x8] sm:$0xff]
  %v65 = vadd.f32 %v61, 0.01
  %v66 = vadd.f32 %v62, 0.01
  %v67 = vlog2.pop %v65
  %v68 = vmul.f32 %v67, 0.6931472
  %v69 = vlog2.pop %v66
  %v70 = vmul.f32 %v69, 0.6931472
  %v71 = vmul.f32 %v63, %v68
  %v72 = vmul.f32 %v64, %v70
  %v73 = vsub.f32 %v71, %v61
  %v74 = vsub.f32 %v72, %v62
  %v75 = vadd.f32 %v73, %v74
  %v76 = vadd.f32 %v60, %v75
  %77 = vst [vmem:[%s2] sm:$0xff] %v76
  // Predicated region
  $region14: #{poisson_log_likelihood_loss.1} parent=0 // pred_check
    _
  $region15: #{poisson_log_likelihood_loss.1} parent=0 // pred_check_branch
    %79 = sbr.rel (0) target = $region17
  $region16: #{poisson_log_likelihood_loss.1} parent=0 // pred_region
    _
  $region17: #{poisson_log_likelihood_loss.1} parent=0 // pred_fallthru
    _
  // Predicated region
  $region18: #{poisson_log_likelihood_loss.1} parent=0 // pred_check
    _
  $region19: #{poisson_log_likelihood_loss.1} parent=0 // pred_check_branch
    %81 = sbr.rel (0) target = $region21
  $region20: #{poisson_log_likelihood_loss.1} parent=0 // pred_region
    _
  $region21: #{poisson_log_likelihood_loss.1} parent=0 // pred_fallthru
    _

</llo_original>
